<compile_context>
chip_gen: v5e
topology: v5e:2x2
jax: 0.10.0
libtpu: 0.0.40
codegen_flags: <defaults>
</compile_context>

<pallas_src>
import functools

import jax
import jax.numpy as jnp
from jax.experimental import pallas as pl
from jax.experimental.pallas import tpu as pltpu


def _cdiv(a, b):
    return -(-a // b)


def _conv_bn_relu_kernel(x_ref, h_ref, w_ref, b_ref, o_ref, xwin_ref, *, taps, tl):
    # x_ref:    (1, Cin, TL)    bf16  main flat-spatial tile
    # h_ref:    (1, Cin, TH)    bf16  halo: the TH elements immediately after the tile
    # w_ref:    (9, CoT, Cin)   bf16  BN-scale-folded conv weights, tap-major
    # b_ref:    (CoT, 1)        f32   folded BN bias
    # o_ref:    (1, CoT, TL)    f32
    # xwin_ref: (Cin, TL + TH)  bf16  scratch: tile + halo stored contiguously
    xwin_ref[:, :tl] = x_ref[0]
    xwin_ref[:, tl:] = h_ref[0]

    co_t = o_ref.shape[1]
    acc = jnp.zeros((co_t, tl), jnp.float32)
    for t, off in enumerate(taps):                      # 9 static taps, unrolled
        tap = xwin_ref[:, off:off + tl]                 # (Cin, TL) shifted window
        acc = acc + jnp.dot(w_ref[t], tap, preferred_element_type=jnp.float32)
    o_ref[0] = jnp.maximum(acc + b_ref[...], 0.0).astype(o_ref.dtype)


def conv_bn_relu(x_nchw, weight, gamma, beta, running_mean, running_var,
                 eps=1e-5, vmem_budget_bytes=8 * 2 ** 20, max_tile_lanes=None):
    """Fused Conv(3x3,s1,p1,bias=False)+BN(eval)+ReLU. (N,Cin,H,W) f32 -> (N,Cout,H,W) f32."""
    N, Cin, H, W = x_nchw.shape
    Cout = weight.shape[0]
    KH = KW = 3
    Hp, Wp = H + 2, W + 2

    # ---- fold BN (eval mode): scale into the weight, bias kept separate ----
    inv_std = jax.lax.rsqrt(running_var.astype(jnp.float32) + eps)
    scale = gamma.astype(jnp.float32) * inv_std                             # (Cout,)
    bias = beta.astype(jnp.float32) - running_mean.astype(jnp.float32) * scale
    w_folded = weight.astype(jnp.float32) * scale[:, None, None, None]      # (Cout,Cin,3,3)
    # (Cout,Cin,3,3) -> (9, Cout, Cin), tap index t = ky*3 + kx
    w_all = jnp.transpose(w_folded, (2, 3, 0, 1)).reshape(KH * KW, Cout, Cin)
    w_all = w_all.astype(jnp.bfloat16)
    bias_col = bias.reshape(Cout, 1)

    # ---- channels-first, spatial pad of 1, flatten spatial (no NHWC transposes) ----
    x_pad = jnp.pad(x_nchw, ((0, 0), (0, 0), (1, 1), (1, 1))).astype(jnp.bfloat16)
    x_flat = x_pad.reshape(N, Cin, Hp * Wp)

    # y_flat[q] = sum_t w_t @ x_flat[q + off_t], off_t = ky*Wp + kx.  Valid outputs sit
    # at q = i*Wp + j (i<H, j<W); the last 2 columns of each flat row are wrap-around
    # garbage and get sliced off after the kernel.
    taps = tuple(ky * Wp + kx for ky in range(KH) for kx in range(KW))
    q_len = H * Wp

    # ---- Cout tiling (match MXU width when Cout is large) ----
    if Cout >= 512 and Cout % 256 == 0:
        co_t = 256
    elif Cout >= 256 and Cout % 128 == 0:
        co_t = 128
    else:
        co_t = Cout
    n_co = Cout // co_t

    # ---- spatial tile: multiple of the halo size TH, sized to a VMEM budget ----
    th = 128 * _cdiv(2 * Wp + 2, 128)        # halo covers the largest tap offset
    # rough per-flat-element VMEM bytes: bf16 inputs (2 bufs + scratch) + f32 acc/out (2 bufs)
    bytes_per_lane = 3 * Cin * 2 + 3 * co_t * 4
    tl = max(th, (vmem_budget_bytes // bytes_per_lane) // th * th)
    if max_tile_lanes is not None:
        tl = min(tl, max(th, (max_tile_lanes // th) * th))
    tl = min(tl, _cdiv(q_len, th) * th)
    if N == 1 and tl >= q_len and q_len > th:
        # keep at least 2 grid steps so both TensorCores (v7x) get work
        tl = _cdiv(_cdiv(q_len, th), 2) * th
    q_pad = _cdiv(q_len, tl) * tl
    n_sp = q_pad // tl
    r = tl // th                              # halo block index stride

    lin = q_pad + th                          # padded flat length (room for last halo)
    x_flat = jnp.pad(x_flat, ((0, 0), (0, 0), (0, lin - Hp * Wp)))

    kernel = functools.partial(_conv_bn_relu_kernel, taps=taps, tl=tl)
    out_flat = pl.pallas_call(
        kernel,
        out_shape=jax.ShapeDtypeStruct((N, Cout, q_pad), jnp.float32),
        grid_spec=pltpu.PrefetchScalarGridSpec(
            num_scalar_prefetch=0,
            grid=(N, n_sp, n_co),
            in_specs=[
                pl.BlockSpec((1, Cin, tl), lambda n, i, j: (n, 0, i)),            # main tile
                pl.BlockSpec((1, Cin, th), lambda n, i, j: (n, 0, (i + 1) * r)),  # halo
                pl.BlockSpec((KH * KW, co_t, Cin), lambda n, i, j: (0, j, 0)),    # weights
                pl.BlockSpec((co_t, 1), lambda n, i, j: (j, 0)),                  # bias
            ],
            out_specs=pl.BlockSpec((1, co_t, tl), lambda n, i, j: (n, j, i)),
            scratch_shapes=[pltpu.VMEM((Cin, tl + th), jnp.bfloat16)],
        ),
        compiler_params=pltpu.CompilerParams(
            dimension_semantics=("parallel", "parallel", "parallel"),
            vmem_limit_bytes=48 * 1024 * 1024),
    )(x_flat, x_flat, w_all, bias_col)

    # drop tile padding + the 2 wrap-around columns per row, restore (N, Cout, H, W)
    out = out_flat[:, :, :H * Wp].reshape(N, Cout, H, Wp)[:, :, :, :W]
    return out


def _reference(x, weight, gamma, beta, running_mean, running_var, eps=1e-5):
    # Pure-JAX reference emulating the kernel's bf16 operand quantization
    # (accumulation stays f32), so the check can be tight.
    inv_std = jax.lax.rsqrt(running_var + eps)
    scale = gamma * inv_std
    bias = beta - running_mean * scale
    wq = (weight * scale[:, None, None, None]).astype(jnp.bfloat16).astype(jnp.float32)
    xq = x.astype(jnp.bfloat16).astype(jnp.float32)
    conv = jax.lax.conv_general_dilated(
        xq, wq, window_strides=(1, 1), padding=((1, 1), (1, 1)),
        dimension_numbers=("NCHW", "OIHW", "NCHW"))
    return jnp.maximum(conv + bias[None, :, None, None], 0.0)


if __name__ == "__main__":
    key = jax.random.PRNGKey(0)
    k_x, k_w, k_g, k_b, k_m, k_v = jax.random.split(key, 6)

    # primary test: small config implied by the module
    N, Cin, Cout, H, W = 2, 4, 8, 16, 16
    x = jax.random.normal(k_x, (N, Cin, H, W), dtype=jnp.float32)
    weight = jax.random.normal(k_w, (Cout, Cin, 3, 3), dtype=jnp.float32) * 0.1
    gamma = jax.random.normal(k_g, (Cout,), dtype=jnp.float32) * 0.1 + 1.0
    beta = jax.random.normal(k_b, (Cout,), dtype=jnp.float32) * 0.1
    running_mean = jax.random.normal(k_m, (Cout,), dtype=jnp.float32) * 0.1
    running_var = jnp.abs(jax.random.normal(k_v, (Cout,), dtype=jnp.float32)) * 0.1 + 1.0

    out = conv_bn_relu(x, weight, gamma, beta, running_mean, running_var)
    out = jax.block_until_ready(out)
    ref = _reference(x, weight, gamma, beta, running_mean, running_var)
    assert out.shape == (N, Cout, H, W)
    assert jnp.allclose(out, ref, atol=1e-2, rtol=1e-2), "mismatch vs reference (test 1)"

    # secondary test: exercises multi-tile spatial grid, halo handling and Cout tiling
    N2, Cin2, Cout2, H2, W2 = 1, 8, 256, 24, 24
    k2 = jax.random.split(jax.random.PRNGKey(1), 6)
    x2 = jax.random.normal(k2[0], (N2, Cin2, H2, W2), dtype=jnp.float32)
    w2 = jax.random.normal(k2[1], (Cout2, Cin2, 3, 3), dtype=jnp.float32) * 0.1
    g2 = jax.random.normal(k2[2], (Cout2,), dtype=jnp.float32) * 0.1 + 1.0
    b2 = jax.random.normal(k2[3], (Cout2,), dtype=jnp.float32) * 0.1
    m2 = jax.random.normal(k2[4], (Cout2,), dtype=jnp.float32) * 0.1
    v2 = jnp.abs(jax.random.normal(k2[5], (Cout2,), dtype=jnp.float32)) * 0.1 + 1.0
    out2 = conv_bn_relu(x2, w2, g2, b2, m2, v2, max_tile_lanes=256)
    out2 = jax.block_until_ready(out2)
    ref2 = _reference(x2, w2, g2, b2, m2, v2)
    assert out2.shape == (N2, Cout2, H2, W2)
    assert jnp.allclose(out2, ref2, atol=1e-2, rtol=1e-2), "mismatch vs reference (test 2)"

    print("KERNEL_OK")
</pallas_src>

<mosaic_0001>
module attributes {stable_mosaic.version = 11 : i64} {
  func.func @_conv_bn_relu_kernel(%arg0: i32, %arg1: i32, %arg2: i32, %arg3: memref<1x4x384xbf16, #tpu.memory_space<vmem>>, %arg4: memref<1x4x128xbf16, #tpu.memory_space<vmem>>, %arg5: memref<9x8x4xbf16, #tpu.memory_space<vmem>>, %arg6: memref<8x1xf32, #tpu.memory_space<vmem>>, %arg7: memref<1x8x384xf32, #tpu.memory_space<vmem>>, %arg8: memref<4x512xbf16, #tpu.memory_space<vmem>>) attributes {dimension_semantics = [#tpu.dimension_semantics<parallel>, #tpu.dimension_semantics<parallel>, #tpu.dimension_semantics<parallel>], iteration_bounds = array<i64: 2, 1, 1>, scalar_prefetch = 0 : i64, scratch_operands = 1 : i64, tpu.core_type = #tpu.core_type<tc>, window_params = [{transform_indices = @transform_0, window_bounds = array<i64: 1, 4, 384>}, {transform_indices = @transform_1, window_bounds = array<i64: 1, 4, 128>}, {transform_indices = @transform_2, window_bounds = array<i64: 9, 8, 4>}, {transform_indices = @transform_3, window_bounds = array<i64: 8, 1>}, {transform_indices = @transform_4, window_bounds = array<i64: 1, 8, 384>}]} {
    %c0 = arith.constant 0 : index
    %c0_0 = arith.constant 0 : index
    %c0_1 = arith.constant 0 : index
    %0 = vector.load %arg3[%c0, %c0_0, %c0_1] : memref<1x4x384xbf16, #tpu.memory_space<vmem>>, vector<1x4x384xbf16>
    %1 = vector.shape_cast %0 : vector<1x4x384xbf16> to vector<4x384xbf16>
    %c0_2 = arith.constant 0 : index
    %c0_3 = arith.constant 0 : index
    %2 = vector.load %arg8[%c0_2, %c0_3] : memref<4x512xbf16, #tpu.memory_space<vmem>>, vector<4x384xbf16>
    tpu.vector_store %arg8[%c0_2, %c0_3], %1 {strides = array<i32>} : memref<4x512xbf16, #tpu.memory_space<vmem>>, vector<4x384xbf16>,
    %c0_4 = arith.constant 0 : index
    %c0_5 = arith.constant 0 : index
    %c0_6 = arith.constant 0 : index
    %3 = vector.load %arg4[%c0_4, %c0_5, %c0_6] : memref<1x4x128xbf16, #tpu.memory_space<vmem>>, vector<1x4x128xbf16>
    %4 = vector.shape_cast %3 : vector<1x4x128xbf16> to vector<4x128xbf16>
    %c0_7 = arith.constant 0 : index
    %c384 = arith.constant 384 : index
    %5 = vector.load %arg8[%c0_7, %c384] : memref<4x512xbf16, #tpu.memory_space<vmem>>, vector<4x128xbf16>
    tpu.vector_store %arg8[%c0_7, %c384], %4 {strides = array<i32>} : memref<4x512xbf16, #tpu.memory_space<vmem>>, vector<4x128xbf16>,
    %cst = arith.constant 0.000000e+00 : f32
    %6 = vector.broadcast %cst : f32 to vector<8x384xf32>
    %c0_8 = arith.constant 0 : index
    %c0_9 = arith.constant 0 : index
    %7 = vector.load %arg8[%c0_8, %c0_9] : memref<4x512xbf16, #tpu.memory_space<vmem>>, vector<4x384xbf16>
    %c0_10 = arith.constant 0 : index
    %c0_11 = arith.constant 0 : index
    %c0_12 = arith.constant 0 : index
    %8 = vector.load %arg5[%c0_10, %c0_11, %c0_12] : memref<9x8x4xbf16, #tpu.memory_space<vmem>>, vector<1x8x4xbf16>
    %9 = vector.shape_cast %8 : vector<1x8x4xbf16> to vector<8x4xbf16>
    %cst_13 = arith.constant dense<0.000000e+00> : vector<8x384xf32>
    %10 = tpu.matmul %9, %7, %cst_13 {dimension_numbers = #tpu.dot_dimension_numbers<[1], [0], [0], [1], [0, 0, 1, 1], [], []>} : vector<8x4xbf16>, vector<4x384xbf16>, vector<8x384xf32> -> vector<8x384xf32>
    %11 = arith.addf %6, %10 : vector<8x384xf32>
    %c0_14 = arith.constant 0 : index
    %c1 = arith.constant 1 : index
    %12 = vector.load %arg8[%c0_14, %c1] : memref<4x512xbf16, #tpu.memory_space<vmem>>, vector<4x384xbf16>
    %c1_15 = arith.constant 1 : index
    %c0_16 = arith.constant 0 : index
    %c0_17 = arith.constant 0 : index
    %13 = vector.load %arg5[%c1_15, %c0_16, %c0_17] : memref<9x8x4xbf16, #tpu.memory_space<vmem>>, vector<1x8x4xbf16>
    %14 = vector.shape_cast %13 : vector<1x8x4xbf16> to vector<8x4xbf16>
    %cst_18 = arith.constant dense<0.000000e+00> : vector<8x384xf32>
    %15 = tpu.matmul %14, %12, %cst_18 {dimension_numbers = #tpu.dot_dimension_numbers<[1], [0], [0], [1], [0, 0, 1, 1], [], []>} : vector<8x4xbf16>, vector<4x384xbf16>, vector<8x384xf32> -> vector<8x384xf32>
    %16 = arith.addf %11, %15 : vector<8x384xf32>
    %c0_19 = arith.constant 0 : index
    %c2 = arith.constant 2 : index
    %17 = vector.load %arg8[%c0_19, %c2] : memref<4x512xbf16, #tpu.memory_space<vmem>>, vector<4x384xbf16>
    %c2_20 = arith.constant 2 : index
    %c0_21 = arith.constant 0 : index
    %c0_22 = arith.constant 0 : index
    %18 = vector.load %arg5[%c2_20, %c0_21, %c0_22] : memref<9x8x4xbf16, #tpu.memory_space<vmem>>, vector<1x8x4xbf16>
    %19 = vector.shape_cast %18 : vector<1x8x4xbf16> to vector<8x4xbf16>
    %cst_23 = arith.constant dense<0.000000e+00> : vector<8x384xf32>
    %20 = tpu.matmul %19, %17, %cst_23 {dimension_numbers = #tpu.dot_dimension_numbers<[1], [0], [0], [1], [0, 0, 1, 1], [], []>} : vector<8x4xbf16>, vector<4x384xbf16>, vector<8x384xf32> -> vector<8x384xf32>
    %21 = arith.addf %16, %20 : vector<8x384xf32>
    %c0_24 = arith.constant 0 : index
    %c18 = arith.constant 18 : index
    %22 = vector.load %arg8[%c0_24, %c18] : memref<4x512xbf16, #tpu.memory_space<vmem>>, vector<4x384xbf16>
    %c3 = arith.constant 3 : index
    %c0_25 = arith.constant 0 : index
    %c0_26 = arith.constant 0 : index
    %23 = vector.load %arg5[%c3, %c0_25, %c0_26] : memref<9x8x4xbf16, #tpu.memory_space<vmem>>, vector<1x8x4xbf16>
    %24 = vector.shape_cast %23 : vector<1x8x4xbf16> to vector<8x4xbf16>
    %cst_27 = arith.constant dense<0.000000e+00> : vector<8x384xf32>
    %25 = tpu.matmul %24, %22, %cst_27 {dimension_numbers = #tpu.dot_dimension_numbers<[1], [0], [0], [1], [0, 0, 1, 1], [], []>} : vector<8x4xbf16>, vector<4x384xbf16>, vector<8x384xf32> -> vector<8x384xf32>
    %26 = arith.addf %21, %25 : vector<8x384xf32>
    %c0_28 = arith.constant 0 : index
    %c19 = arith.constant 19 : index
    %27 = vector.load %arg8[%c0_28, %c19] : memref<4x512xbf16, #tpu.memory_space<vmem>>, vector<4x384xbf16>
    %c4 = arith.constant 4 : index
    %c0_29 = arith.constant 0 : index
    %c0_30 = arith.constant 0 : index
    %28 = vector.load %arg5[%c4, %c0_29, %c0_30] : memref<9x8x4xbf16, #tpu.memory_space<vmem>>, vector<1x8x4xbf16>
    %29 = vector.shape_cast %28 : vector<1x8x4xbf16> to vector<8x4xbf16>
    %cst_31 = arith.constant dense<0.000000e+00> : vector<8x384xf32>
    %30 = tpu.matmul %29, %27, %cst_31 {dimension_numbers = #tpu.dot_dimension_numbers<[1], [0], [0], [1], [0, 0, 1, 1], [], []>} : vector<8x4xbf16>, vector<4x384xbf16>, vector<8x384xf32> -> vector<8x384xf32>
    %31 = arith.addf %26, %30 : vector<8x384xf32>
    %c0_32 = arith.constant 0 : index
    %c20 = arith.constant 20 : index
    %32 = vector.load %arg8[%c0_32, %c20] : memref<4x512xbf16, #tpu.memory_space<vmem>>, vector<4x384xbf16>
    %c5 = arith.constant 5 : index
    %c0_33 = arith.constant 0 : index
    %c0_34 = arith.constant 0 : index
    %33 = vector.load %arg5[%c5, %c0_33, %c0_34] : memref<9x8x4xbf16, #tpu.memory_space<vmem>>, vector<1x8x4xbf16>
    %34 = vector.shape_cast %33 : vector<1x8x4xbf16> to vector<8x4xbf16>
    %cst_35 = arith.constant dense<0.000000e+00> : vector<8x384xf32>
    %35 = tpu.matmul %34, %32, %cst_35 {dimension_numbers = #tpu.dot_dimension_numbers<[1], [0], [0], [1], [0, 0, 1, 1], [], []>} : vector<8x4xbf16>, vector<4x384xbf16>, vector<8x384xf32> -> vector<8x384xf32>
    %36 = arith.addf %31, %35 : vector<8x384xf32>
    %c0_36 = arith.constant 0 : index
    %c36 = arith.constant 36 : index
    %37 = vector.load %arg8[%c0_36, %c36] : memref<4x512xbf16, #tpu.memory_space<vmem>>, vector<4x384xbf16>
    %c6 = arith.constant 6 : index
    %c0_37 = arith.constant 0 : index
    %c0_38 = arith.constant 0 : index
    %38 = vector.load %arg5[%c6, %c0_37, %c0_38] : memref<9x8x4xbf16, #tpu.memory_space<vmem>>, vector<1x8x4xbf16>
    %39 = vector.shape_cast %38 : vector<1x8x4xbf16> to vector<8x4xbf16>
    %cst_39 = arith.constant dense<0.000000e+00> : vector<8x384xf32>
    %40 = tpu.matmul %39, %37, %cst_39 {dimension_numbers = #tpu.dot_dimension_numbers<[1], [0], [0], [1], [0, 0, 1, 1], [], []>} : vector<8x4xbf16>, vector<4x384xbf16>, vector<8x384xf32> -> vector<8x384xf32>
    %41 = arith.addf %36, %40 : vector<8x384xf32>
    %c0_40 = arith.constant 0 : index
    %c37 = arith.constant 37 : index
    %42 = vector.load %arg8[%c0_40, %c37] : memref<4x512xbf16, #tpu.memory_space<vmem>>, vector<4x384xbf16>
    %c7 = arith.constant 7 : index
    %c0_41 = arith.constant 0 : index
    %c0_42 = arith.constant 0 : index
    %43 = vector.load %arg5[%c7, %c0_41, %c0_42] : memref<9x8x4xbf16, #tpu.memory_space<vmem>>, vector<1x8x4xbf16>
    %44 = vector.shape_cast %43 : vector<1x8x4xbf16> to vector<8x4xbf16>
    %cst_43 = arith.constant dense<0.000000e+00> : vector<8x384xf32>
    %45 = tpu.matmul %44, %42, %cst_43 {dimension_numbers = #tpu.dot_dimension_numbers<[1], [0], [0], [1], [0, 0, 1, 1], [], []>} : vector<8x4xbf16>, vector<4x384xbf16>, vector<8x384xf32> -> vector<8x384xf32>
    %46 = arith.addf %41, %45 : vector<8x384xf32>
    %c0_44 = arith.constant 0 : index
    %c38 = arith.constant 38 : index
    %47 = vector.load %arg8[%c0_44, %c38] : memref<4x512xbf16, #tpu.memory_space<vmem>>, vector<4x384xbf16>
    %c8 = arith.constant 8 : index
    %c0_45 = arith.constant 0 : index
    %c0_46 = arith.constant 0 : index
    %48 = vector.load %arg5[%c8, %c0_45, %c0_46] : memref<9x8x4xbf16, #tpu.memory_space<vmem>>, vector<1x8x4xbf16>
    %49 = vector.shape_cast %48 : vector<1x8x4xbf16> to vector<8x4xbf16>
    %cst_47 = arith.constant dense<0.000000e+00> : vector<8x384xf32>
    %50 = tpu.matmul %49, %47, %cst_47 {dimension_numbers = #tpu.dot_dimension_numbers<[1], [0], [0], [1], [0, 0, 1, 1], [], []>} : vector<8x4xbf16>, vector<4x384xbf16>, vector<8x384xf32> -> vector<8x384xf32>
    %51 = arith.addf %46, %50 : vector<8x384xf32>
    %c0_48 = arith.constant 0 : index
    %c0_49 = arith.constant 0 : index
    %52 = vector.load %arg6[%c0_48, %c0_49] : memref<8x1xf32, #tpu.memory_space<vmem>>, vector<8x1xf32>
    %53 = vector.broadcast %52 : vector<8x1xf32> to vector<8x384xf32>
    %54 = arith.addf %51, %53 : vector<8x384xf32>
    %cst_50 = arith.constant 0.000000e+00 : f32
    %55 = vector.broadcast %cst_50 : f32 to vector<8x384xf32>
    %56 = arith.maximumf %54, %55 : vector<8x384xf32>
    %c0_51 = arith.constant 0 : index
    %c0_52 = arith.constant 0 : index
    %c0_53 = arith.constant 0 : index
    %57 = vector.load %arg7[%c0_51, %c0_52, %c0_53] : memref<1x8x384xf32, #tpu.memory_space<vmem>>, vector<1x8x384xf32>
    %58 = vector.shape_cast %57 : vector<1x8x384xf32> to vector<8x384xf32>
    %59 = vector.shape_cast %56 : vector<8x384xf32> to vector<1x8x384xf32>
    tpu.vector_store %arg7[%c0_51, %c0_52, %c0_53], %59 {strides = array<i32>} : memref<1x8x384xf32, #tpu.memory_space<vmem>>, vector<1x8x384xf32>,
    return
  }
  func.func @transform_0(%arg0: i32, %arg1: i32, %arg2: i32) -> (i32, i32, i32) {
    %c0_i32 = arith.constant 0 : i32
    %c0_i32_0 = arith.constant 0 : i32
    return %arg0, %c0_i32, %arg1 : i32, i32, i32
  }
  func.func @transform_1(%arg0: i32, %arg1: i32, %arg2: i32) -> (i32, i32, i32) {
    %c1_i32 = arith.constant 1 : i32
    %0 = arith.addi %arg1, %c1_i32 : i32
    %c3_i32 = arith.constant 3 : i32
    %1 = arith.muli %0, %c3_i32 : i32
    %c0_i32 = arith.constant 0 : i32
    %c0_i32_0 = arith.constant 0 : i32
    return %arg0, %c0_i32, %1 : i32, i32, i32
  }
  func.func @transform_2(%arg0: i32, %arg1: i32, %arg2: i32) -> (i32, i32, i32) {
    %c0_i32 = arith.constant 0 : i32
    %c0_i32_0 = arith.constant 0 : i32
    %c0_i32_1 = arith.constant 0 : i32
    return %c0_i32, %arg2, %c0_i32_0 : i32, i32, i32
  }
  func.func @transform_3(%arg0: i32, %arg1: i32, %arg2: i32) -> (i32, i32) {
    %c0_i32 = arith.constant 0 : i32
    %c0_i32_0 = arith.constant 0 : i32
    return %arg2, %c0_i32 : i32, i32
  }
  func.func @transform_4(%arg0: i32, %arg1: i32, %arg2: i32) -> (i32, i32, i32) {
    %c0_i32 = arith.constant 0 : i32
    return %arg0, %arg2, %arg1 : i32, i32, i32
  }
}

</mosaic_0001>

<llo_original>
// kernel: tpu_custom_call.1
$region0: #{tpu_custom_call.1}
  #allocation0 [shape = 'u32[]', space=smem, size = 0x4, offset = 0x4, fixed_abs, tag = 'smem constant byte address 0x4 - core index']
  #allocation1 [shape = 'u32[72,128]{1,0:T(1,128)}', space=vmem, size = 0x9000, scoped, tag = 'internal scratch']
  #allocation2 [shape = 'bf16[4,512]{1,0:T(4,128)(2,1)}', space=vmem, size = 0x1000, scoped, tag = 'scratch operand']
  %s0 = inlined_call_operand.vmem [shape: bf16[2,4,512], index: 0, kind: input, shape index: {}]
  %s1 = inlined_call_operand.vmem [shape: bf16[2,4,512], index: 1, kind: input, shape index: {}]
  %s2 = inlined_call_operand.vmem [shape: bf16[9,8,4], index: 2, kind: input, shape index: {}]
  %s3 = inlined_call_operand.vmem [shape: f32[8,1], index: 3, kind: input, shape index: {}]
  %s4 = inlined_call_operand.hbm [shape: f32[2,8,384], index: 4, kind: output, shape index: {}]
  %s5 = sld [smem:[#allocation0]]
  $region49: #{tpu_custom_call.1} parent=0
    _
  %s7 = ssub.s32 1, %s5
  %s8 = scalar_select 0, %s7, %s5
  $region1: #{tpu_custom_call.1} parent=0
    #allocation3 [shape = 'u8[24576]{0}', space=vmem, size = 0x6000, scoped, tag = 'output window, operand 0']
    #allocation4 [shape = 's32[2]{0}', space=sflag, size = 0x8, scoped, tag = 'scoped memory for tpu_custom_call.1']
    %9 = vsyncpa [#allocation4], 0
    %s10 = scalar_lea.sflag [#allocation4], 1
    %11 = vsyncpa %s10, 0
    loop: start=0, step=1, limit=4
    $region2: #{tpu_custom_call.1} parent=1 // loop_pre_header
      _
    $region3: #{tpu_custom_call.1} parent=1 // loop_header
      %s13 = sphi 0, %s17
      %p14 = scmp.ge.s32.totalorder %s13, 4
      %s20 = sphi 0, %s39
      %s21 = sphi 0, %s35
      %s22 = sphi 0, %s31
      %s23 = sphi 0, %s20
      %s24 = sphi 0, %s21
      %s25 = sphi 0, %s22
      %s26 = sphi 0, %s23
      %s27 = sphi 0, %s24
      %s28 = sphi 0, %s25
      %s44 = sphi 0, %s46
      %s47 = sphi 0, %s44
      %s48 = sphi 0, %s47
      %s64 = sphi 0, %s48
      %s76 = sphi 0, %s78
      %s79 = sphi 0, %s76
      %s80 = sphi 0, %s79
      %s96 = sphi 0, %s80
      %s102 = sphi 0, %s104
      %s105 = sphi 0, %s102
      %s106 = sphi 0, %s105
      %s122 = sphi 0, %s106
      %s128 = sphi 0, %s130
      %s131 = sphi 0, %s128
      %s132 = sphi 0, %s131
      %s148 = sphi 0, %s132
      %s158 = sphi 0, %s160
      %s161 = sphi 0, %s158
      %s162 = sphi 0, %s161
      %s178 = sphi 0, %s162
    $region4: #{tpu_custom_call.1} parent=1 // loop_header_branch
      %16 = sbr.rel (%p14) target = $region8
    $region5: #{tpu_custom_call.1} parent=1 // loop_body
      %s18 = ssub.s32 %s13, 1
      %s19 = ssub.s32 %s13, 2
      %s29 = sadd.s32 1, %s22
      %p30 = scmp.ge.s32.totalorder %s29, 1
      %s31 = scalar_select %p30, 0, %s29
      %s32 = sadd.s32 1, %s21
      %s33 = scalar_select %p30, %s32, %s21
      %p34 = scmp.ge.s32.totalorder %s33, 1
      %s35 = scalar_select %p34, 0, %s33
      %s36 = sadd.s32 1, %s20
      %s37 = scalar_select %p34, %s36, %s20
      %p38 = scmp.ge.s32.totalorder %s37, 2
      %s39 = scalar_select %p38, 0, %s37
      %s40 = ssub.s32 %s20, %s39
      %s41 = ssub.s32 %s21, %s35
      %s42 = sor.u32 %s40, %s41
      %p43 = scmp.eq.s32.totalorder %s42, 0
      %s45 = sadd.s32 %s44, 1
      %s46 = scalar_select %p43, %s44, %s45
      %p49 = pneg %p43
      %p50 = scmp.eq.s32.totalorder %s13, 1
      %p51 = por %p49, %p50
      %p52 = scmp.ne.s32.totalorder %s44, %s47
      %p53 = scmp.eq.s32.totalorder %s13, 0
      %p54 = por %p52, %p53
      %p55 = scmp.ne.s32.totalorder %s44, %s47
      %p56 = scmp.eq.s32.totalorder %s18, 1
      %p57 = por %p55, %p56
      %p58 = scmp.ne.s32.totalorder %s47, %s48
      %p59 = scmp.eq.s32.totalorder %s18, 0
      %p60 = por %p58, %p59
      %p61 = scmp.ne.s32.totalorder %s47, %s48
      %p62 = scmp.eq.s32.totalorder %s19, 1
      %p63 = por %p61, %p62
      %p65 = scmp.ne.s32.totalorder %s48, %s64
      %p66 = scmp.eq.s32.totalorder %s19, 0
      %p67 = por %p65, %p66
      %s68 = sadd.s32 %s21, 1
      %s69 = smul.u32 %s68, 3
      %s70 = sadd.s32 %s35, 1
      %s71 = smul.u32 %s70, 3
      %s72 = ssub.s32 %s20, %s39
      %s73 = ssub.s32 %s69, %s71
      %s74 = sor.u32 %s72, %s73
      %p75 = scmp.eq.s32.totalorder %s74, 0
      %s77 = sadd.s32 %s76, 1
      %s78 = scalar_select %p75, %s76, %s77
      %p81 = pneg %p75
      %p82 = scmp.eq.s32.totalorder %s13, 1
      %p83 = por %p81, %p82
      %p84 = scmp.ne.s32.totalorder %s76, %s79
      %p85 = scmp.eq.s32.totalorder %s13, 0
      %p86 = por %p84, %p85
      %p87 = scmp.ne.s32.totalorder %s76, %s79
      %p88 = scmp.eq.s32.totalorder %s18, 1
      %p89 = por %p87, %p88
      %p90 = scmp.ne.s32.totalorder %s79, %s80
      %p91 = scmp.eq.s32.totalorder %s18, 0
      %p92 = por %p90, %p91
      %p93 = scmp.ne.s32.totalorder %s79, %s80
      %p94 = scmp.eq.s32.totalorder %s19, 1
      %p95 = por %p93, %p94
      %p97 = scmp.ne.s32.totalorder %s80, %s96
      %p98 = scmp.eq.s32.totalorder %s19, 0
      %p99 = por %p97, %p98
      %s100 = ssub.s32 %s22, %s31
      %p101 = scmp.eq.s32.totalorder %s100, 0
      %s103 = sadd.s32 %s102, 1
      %s104 = scalar_select %p101, %s102, %s103
      %p107 = pneg %p101
      %p108 = scmp.eq.s32.totalorder %s13, 1
      %p109 = por %p107, %p108
      %p110 = scmp.ne.s32.totalorder %s102, %s105
      %p111 = scmp.eq.s32.totalorder %s13, 0
      %p112 = por %p110, %p111
      %p113 = scmp.ne.s32.totalorder %s102, %s105
      %p114 = scmp.eq.s32.totalorder %s18, 1
      %p115 = por %p113, %p114
      %p116 = scmp.ne.s32.totalorder %s105, %s106
      %p117 = scmp.eq.s32.totalorder %s18, 0
      %p118 = por %p116, %p117
      %p119 = scmp.ne.s32.totalorder %s105, %s106
      %p120 = scmp.eq.s32.totalorder %s19, 1
      %p121 = por %p119, %p120
      %p123 = scmp.ne.s32.totalorder %s106, %s122
      %p124 = scmp.eq.s32.totalorder %s19, 0
      %p125 = por %p123, %p124
      %s126 = ssub.s32 %s22, %s31
      %p127 = scmp.eq.s32.totalorder %s126, 0
      %s129 = sadd.s32 %s128, 1
      %s130 = scalar_select %p127, %s128, %s129
      %p133 = pneg %p127
      %p134 = scmp.eq.s32.totalorder %s13, 1
      %p135 = por %p133, %p134
      %p136 = scmp.ne.s32.totalorder %s128, %s131
      %p137 = scmp.eq.s32.totalorder %s13, 0
      %p138 = por %p136, %p137
      %p139 = scmp.ne.s32.totalorder %s128, %s131
      %p140 = scmp.eq.s32.totalorder %s18, 1
      %p141 = por %p139, %p140
      %p142 = scmp.ne.s32.totalorder %s131, %s132
      %p143 = scmp.eq.s32.totalorder %s18, 0
      %p144 = por %p142, %p143
      %p145 = scmp.ne.s32.totalorder %s131, %s132
      %p146 = scmp.eq.s32.totalorder %s19, 1
      %p147 = por %p145, %p146
      %p149 = scmp.ne.s32.totalorder %s132, %s148
      %p150 = scmp.eq.s32.totalorder %s19, 0
      %p151 = por %p149, %p150
      %s152 = ssub.s32 %s20, %s39
      %s153 = ssub.s32 %s22, %s31
      %s154 = sor.u32 %s152, %s153
      %s155 = ssub.s32 %s21, %s35
      %s156 = sor.u32 %s154, %s155
      %p157 = scmp.eq.s32.totalorder %s156, 0
      %s159 = sadd.s32 %s158, 1
      %s160 = scalar_select %p157, %s158, %s159
      %p163 = pneg %p157
      %p164 = scmp.eq.s32.totalorder %s13, 1
      %p165 = por %p163, %p164
      %p166 = scmp.ne.s32.totalorder %s158, %s161
      %p167 = scmp.eq.s32.totalorder %s13, 0
      %p168 = por %p166, %p167
      %p169 = scmp.ne.s32.totalorder %s158, %s161
      %p170 = scmp.eq.s32.totalorder %s18, 1
      %p171 = por %p169, %p170
      %p172 = scmp.ne.s32.totalorder %s161, %s162
      %p173 = scmp.eq.s32.totalorder %s18, 0
      %p174 = por %p172, %p173
      %p175 = scmp.ne.s32.totalorder %s161, %s162
      %p176 = scmp.eq.s32.totalorder %s19, 1
      %p177 = por %p175, %p176
      %p179 = scmp.ne.s32.totalorder %s162, %s178
      %p180 = scmp.eq.s32.totalorder %s19, 0
      %p181 = por %p179, %p180
      %p182 = scmp.le.s32.totalorder 1, %s13
      %p183 = scmp.lt.s32.totalorder %s13, 3
      %p184 = pnand %p182, %p183
      %p185 = pneg %p184
      // Predicated region
      $region9: #{tpu_custom_call.1} parent=5 // pred_check
        _
      $region10: #{tpu_custom_call.1} parent=5 // pred_check_branch
        %187 = sbr.rel (%p184) target = $region12
      $region11: #{tpu_custom_call.1} parent=5 // pred_region
        %s188 = ssub.s32 %s13, 1
        // Predicated region
        $region13: #{tpu_custom_call.1} parent=11 // pred_check
          %p189 = pneg %p118
        $region14: #{tpu_custom_call.1} parent=11 // pred_check_branch
          %191 = sbr.rel (%p189) target = $region16
        $region15: #{tpu_custom_call.1} parent=11 // pred_region
          %p192 = scmp.lt.s32.totalorder %s25, 0
          %s193 = scalar_select %p192, %s25, 0
          %s194 = smul.addr %s193, 4
          %s195 = scalar_lea.vmem %s2, %s194
        $region16: #{tpu_custom_call.1} parent=11 // pred_fallthru
          _
        // Predicated region
        $region17: #{tpu_custom_call.1} parent=11 // pred_check
          %p196 = pneg %p144
        $region18: #{tpu_custom_call.1} parent=11 // pred_check_branch
          %198 = sbr.rel (%p196) target = $region20
        $region19: #{tpu_custom_call.1} parent=11 // pred_region
          %p199 = scmp.lt.s32.totalorder %s25, 0
          %s200 = scalar_select %p199, %s25, 0
          %s201 = smul.addr %s200, 8
          %s202 = scalar_lea.vmem %s3, %s201
        $region20: #{tpu_custom_call.1} parent=11 // pred_fallthru
          _
      $region12: #{tpu_custom_call.1} parent=5 // pred_fallthru
        _
      %p203 = scmp.lt.s32.totalorder %s13, 2
      // Predicated region
      $region21: #{tpu_custom_call.1} parent=5 // pred_check
        %p204 = pneg %p203
      $region22: #{tpu_custom_call.1} parent=5 // pred_check_branch
        %206 = sbr.rel (%p204) target = $region24
      $region23: #{tpu_custom_call.1} parent=5 // pred_region
        // Predicated region
        $region25: #{tpu_custom_call.1} parent=23 // pred_check
          %p207 = pneg %p54
        $region26: #{tpu_custom_call.1} parent=23 // pred_check_branch
          %209 = sbr.rel (%p207) target = $region28
        $region27: #{tpu_custom_call.1} parent=23 // pred_region
          %s210 = smul.u32 3, %s21
          %s211 = ssub.s32 4, %s210
          %p212 = scmp.lt.s32.totalorder %s211, 3
          %s213 = scalar_select %p212, %s211, 3
          %s214 = smul.u32 2, %s213
          %p215 = scmp.lt.s32.totalorder %s20, 1
          %s216 = scalar_select %p215, %s20, 1
          %p217 = scmp.lt.s32.totalorder %s210, 3
          %s218 = scalar_select %p217, %s210, 3
          %s219 = smul.addr %s216, 4
          %s220 = sadd.s32 %s218, %s219
          %s221 = smul.addr %s220, 2
          %s222 = scalar_lea.vmem %s0, %s221
          %s223 = smul.u32 3, %s21
          %s224 = ssub.s32 4, %s223
          %p225 = scmp.lt.s32.totalorder %s224, 3
          %s226 = scalar_select %p225, %s224, 3
          %s227 = smul.u32 2, %s226
        $region28: #{tpu_custom_call.1} parent=23 // pred_fallthru
          _
        // Predicated region
        $region29: #{tpu_custom_call.1} parent=23 // pred_check
          %p228 = pneg %p86
        $region30: #{tpu_custom_call.1} parent=23 // pred_check_branch
          %230 = sbr.rel (%p228) target = $region32
        $region31: #{tpu_custom_call.1} parent=23 // pred_region
          %s231 = sadd.s32 %s21, 1
          %s232 = smul.u32 %s231, 3
          %p233 = scmp.lt.s32.totalorder %s20, 1
          %s234 = scalar_select %p233, %s20, 1
          %p235 = scmp.lt.s32.totalorder %s232, 3
          %s236 = scalar_select %p235, %s232, 3
          %s237 = smul.addr %s234, 4
          %s238 = sadd.s32 %s236, %s237
          %s239 = smul.addr %s238, 2
          %s240 = scalar_lea.vmem %s1, %s239
          %s241 = sadd.s32 %s21, 1
          %s242 = smul.u32 %s241, 3
        $region32: #{tpu_custom_call.1} parent=23 // pred_fallthru
          _
      $region24: #{tpu_custom_call.1} parent=5 // pred_fallthru
        _
      %p243 = scmp.le.s32.totalorder 1, %s13
      %p244 = scmp.lt.s32.totalorder %s13, 3
      %p245 = pnand %p243, %p244
      %p246 = pneg %p245
      // Predicated region
      $region33: #{tpu_custom_call.1} parent=5 // pred_check
        _
      $region34: #{tpu_custom_call.1} parent=5 // pred_check_branch
        %248 = sbr.rel (%p245) target = $region36
      $region35: #{tpu_custom_call.1} parent=5 // pred_region
        %s249 = ssub.s32 %s13, 1
        %s250 = smul.u32 3, %s24
        %s251 = ssub.s32 4, %s250
        %p252 = scmp.lt.s32.totalorder %s251, 3
        %s253 = scalar_select %p252, %s251, 3
        %s254 = smul.u32 2, %s253
        %p255 = scmp.lt.s32.totalorder %s23, 1
        %s256 = scalar_select %p255, %s23, 1
        %p257 = scmp.lt.s32.totalorder %s250, 3
        %s258 = scalar_select %p257, %s250, 3
        %s259 = smul.addr %s256, 4
        %s260 = sadd.s32 %s258, %s259
        %s261 = smul.addr %s260, 2
        %s262 = scalar_lea.vmem %s0, %s261
        %p263 = pneg %p60
        %p264 = pneg %p57
        %s265 = sadd.s32 %s24, 1
        %s266 = smul.u32 %s265, 3
        %p267 = scmp.lt.s32.totalorder %s23, 1
        %s268 = scalar_select %p267, %s23, 1
        %p269 = scmp.lt.s32.totalorder %s266, 3
        %s270 = scalar_select %p269, %s266, 3
        %s271 = smul.addr %s268, 4
        %s272 = sadd.s32 %s270, %s271
        %s273 = smul.addr %s272, 2
        %s274 = scalar_lea.vmem %s1, %s273
        %p275 = pneg %p92
        %p276 = pneg %p89
        %p277 = scmp.lt.s32.totalorder %s25, 0
        %s278 = scalar_select %p277, %s25, 0
        %s279 = smul.addr %s278, 4
        %s280 = scalar_lea.vmem %s2, %s279
        %p281 = pneg %p118
        %p282 = pneg %p115
        %p283 = scmp.lt.s32.totalorder %s25, 0
        %s284 = scalar_select %p283, %s25, 0
        %s285 = smul.addr %s284, 8
        %s286 = scalar_lea.vmem %s3, %s285
        %p287 = pneg %p144
        %p288 = pneg %p141
        %p289 = pneg %p174
        %p290 = pneg %p171
        %s291 = sand.u32 %s161, 1
        %s292 = scalar_lea.sflag [#allocation4], %s291
        %s293 = sand.u32 %s161, 1
        %s294 = smul.addr %s293, 24
        %s295 = scalar_lea.vmem [#allocation3], %s294
        %s296 = smul.u32 3, %s24
        %s297 = ssub.s32 4, %s296
        %p298 = scmp.lt.s32.totalorder %s297, 3
        %s299 = scalar_select %p298, %s297, 3
        %s300 = smul.u32 2, %s299
        %p301 = scmp.lt.s32.totalorder %s23, 1
        %s302 = scalar_select %p301, %s23, 1
        %p303 = scmp.lt.s32.totalorder %s296, 3
        %s304 = scalar_select %p303, %s296, 3
        %s305 = smul.addr %s302, 4
        %s306 = sadd.s32 %s304, %s305
        %s307 = smul.addr %s306, 2
        %s308 = scalar_lea.vmem %s0, %s307
        %s309 = smul.u32 3, %s24
        %s310 = ssub.s32 4, %s309
        %p311 = scmp.lt.s32.totalorder %s310, 3
        %s312 = scalar_select %p311, %s310, 3
        %s313 = smul.u32 2, %s312
        %s314 = sadd.s32 %s24, 1
        %s315 = smul.u32 %s314, 3
        %p316 = scmp.lt.s32.totalorder %s23, 1
        %s317 = scalar_select %p316, %s23, 1
        %p318 = scmp.lt.s32.totalorder %s315, 3
        %s319 = scalar_select %p318, %s315, 3
        %s320 = smul.addr %s317, 4
        %s321 = sadd.s32 %s319, %s320
        %s322 = smul.addr %s321, 2
        %s323 = scalar_lea.vmem %s1, %s322
        %s324 = sadd.s32 %s24, 1
        %s325 = smul.u32 %s324, 3
        %p326 = scmp.lt.s32.totalorder %s25, 0
        %s327 = scalar_select %p326, %s25, 0
        %s328 = smul.addr %s327, 4
        %s329 = scalar_lea.vmem %s2, %s328
        %p330 = scmp.lt.s32.totalorder %s25, 0
        %s331 = scalar_select %p330, %s25, 0
        %s332 = smul.addr %s331, 8
        %s333 = scalar_lea.vmem %s3, %s332
        %s334 = smul.u32 3, %s24
        %v336 = vld [vmem:[%s308] sm:$0x3f]
        %337 = vst [vmem:[#allocation2] sm:$0x3f] %v336
        %v338 = vld [vmem:[%s323] sm:$0x3]
        %339 = vst [vmem:[#allocation2 + $0x6] sm:$0x3] %v338
        %v340 = vld [vmem:[#allocation2] sm:$0x3f]
        %v341 = vld [vmem:[%s329] sm:$0xf]
        %v342 = vld [vmem:[#allocation2] sm:$0xff]
        %s343 = scalar_lea.vmem %s329, 4
        %v344 = vld [vmem:[%s343] sm:$0xf]
        %346 = vst [vmem:[#allocation1] ss:$4 sm:$0xff] %v342
        %v347 = vld.sshfl [vmem:[#allocation1] sm:$0xff pattern:$0x73625140]
        %v349 = vld.sshfl [vmem:[#allocation1 + $0x8] sm:$0xff pattern:$0x73625140]
        %v351 = vld.sshfl [vmem:[#allocation1 + $0x10] sm:$0xff pattern:$0x73625140]
        %v353 = vld.sshfl [vmem:[#allocation1 + $0x18] sm:$0xff pattern:$0x73625140]
        %355 = vrot.lane.b32.xlu0 %v347, 127
        %v356 = vpop.permute.xlu0 %355
        %357 = vrot.lane.b32.xlu0 %v349, 127
        %v358 = vpop.permute.xlu0 %357
        %359 = vrot.lane.b32.xlu0 %v351, 127
        %v360 = vpop.permute.xlu0 %359
        %361 = vrot.lane.b32.xlu0 %v353, 127
        %v362 = vpop.permute.xlu0 %361
        %vm363 = vcmask 1039360
        %v364 = vsel %vm363, %v356, %v358
        %v365 = vsel %vm363, %v358, %v360
        %v366 = vsel %vm363, %v360, %v362
        %vm367 = vcmask 31744
        %v369 = vsel %vm367, %v344, 0
        %vm371 = vcmask 1041408
        %v373 = vsel %vm371, %v364, 0
        %v376 = vsel %vm371, %v365, 0
        %v379 = vsel %vm371, %v366, 0
        %381 = vmatpush.bf16.msra.mxu0 0
        %382 = vmatpush.bf16.msra.mxu0 0
        %383 = vmatpush.bf16.msra.mxu0 0
        %384 = vmatpush.bf16.msra.mxu0 0
        %385 = vmatpush.bf16.msra.mxu0 0
        %386 = vmatpush.bf16.msra.mxu0 0
        %387 = vmatpush.bf16.msra.mxu0 0
        %388 = vmatpush.bf16.msra.mxu0 %v373
        %389 = vmatmul.bf16.gmra.mxu0 %v369
        %v390 = vpop.f32.mrf.mxu0
        %v391 = vadd.f32 0.0, %v390
        %v392 = vpop.f32.mrf.mxu0
        %393 = vdwg.mxu0
        %394 = vmatpush.bf16.msra.mxu0 0
        %395 = vmatpush.bf16.msra.mxu0 0
        %396 = vmatpush.bf16.msra.mxu0 0
        %397 = vmatpush.bf16.msra.mxu0 0
        %398 = vmatpush.bf16.msra.mxu0 0
        %399 = vmatpush.bf16.msra.mxu0 0
        %400 = vmatpush.bf16.msra.mxu0 0
        %401 = vmatpush.bf16.msra.mxu0 %v376
        %402 = vmatmul.bf16.gmra.mxu0 %v369
        %v403 = vpop.f32.mrf.mxu0
        %v404 = vadd.f32 0.0, %v403
        %v405 = vpop.f32.mrf.mxu0
        %406 = vdwg.mxu0
        %407 = vmatpush.bf16.msra.mxu0 0
        %408 = vmatpush.bf16.msra.mxu0 0
        %409 = vmatpush.bf16.msra.mxu0 0
        %410 = vmatpush.bf16.msra.mxu0 0
        %411 = vmatpush.bf16.msra.mxu0 0
        %412 = vmatpush.bf16.msra.mxu0 0
        %413 = vmatpush.bf16.msra.mxu0 0
        %414 = vmatpush.bf16.msra.mxu0 %v379
        %415 = vmatmul.bf16.gmra.mxu0 %v369
        %v416 = vpop.f32.mrf.mxu0
        %v417 = vadd.f32 0.0, %v416
        %v418 = vpop.f32.mrf.mxu0
        %419 = vdwg.mxu0
        %421 = vst [vmem:[#allocation1] ss:$4 sm:$0xff] %v340
        %v422 = vld.sshfl [vmem:[#allocation1] sm:$0xff pattern:$0x73625140]
        %v423 = vld.sshfl [vmem:[#allocation1 + $0x8] sm:$0xff pattern:$0x73625140]
        %v424 = vld.sshfl [vmem:[#allocation1 + $0x10] sm:$0xff pattern:$0x73625140]
        %v426 = vsel %vm367, %v341, 0
        %v428 = vsel %vm371, %v422, 0
        %v430 = vsel %vm371, %v423, 0
        %v432 = vsel %vm371, %v424, 0
        %434 = vmatpush.bf16.msra.mxu0 0
        %435 = vmatpush.bf16.msra.mxu0 0
        %436 = vmatpush.bf16.msra.mxu0 0
        %437 = vmatpush.bf16.msra.mxu0 0
        %438 = vmatpush.bf16.msra.mxu0 0
        %439 = vmatpush.bf16.msra.mxu0 0
        %440 = vmatpush.bf16.msra.mxu0 0
        %441 = vmatpush.bf16.msra.mxu0 %v428
        %442 = vmatmul.bf16.gmra.mxu0 %v426
        %v443 = vpop.f32.mrf.mxu0
        %v444 = vadd.f32 %v391, %v443
        %v445 = vpop.f32.mrf.mxu0
        %446 = vdwg.mxu0
        %447 = vmatpush.bf16.msra.mxu0 0
        %448 = vmatpush.bf16.msra.mxu0 0
        %449 = vmatpush.bf16.msra.mxu0 0
        %450 = vmatpush.bf16.msra.mxu0 0
        %451 = vmatpush.bf16.msra.mxu0 0
        %452 = vmatpush.bf16.msra.mxu0 0
        %453 = vmatpush.bf16.msra.mxu0 0
        %454 = vmatpush.bf16.msra.mxu0 %v430
        %455 = vmatmul.bf16.gmra.mxu0 %v426
        %v456 = vpop.f32.mrf.mxu0
        %v457 = vadd.f32 %v404, %v456
        %v458 = vpop.f32.mrf.mxu0
        %459 = vdwg.mxu0
        %460 = vmatpush.bf16.msra.mxu0 0
        %461 = vmatpush.bf16.msra.mxu0 0
        %462 = vmatpush.bf16.msra.mxu0 0
        %463 = vmatpush.bf16.msra.mxu0 0
        %464 = vmatpush.bf16.msra.mxu0 0
        %465 = vmatpush.bf16.msra.mxu0 0
        %466 = vmatpush.bf16.msra.mxu0 0
        %467 = vmatpush.bf16.msra.mxu0 %v432
        %468 = vmatmul.bf16.gmra.mxu0 %v426
        %v469 = vpop.f32.mrf.mxu0
        %v470 = vadd.f32 %v417, %v469
        %v471 = vpop.f32.mrf.mxu0
        %472 = vdwg.mxu0
        %v473 = vld [vmem:[#allocation2] sm:$0xff]
        %s474 = scalar_lea.vmem %s329, 8
        %v475 = vld [vmem:[%s474] sm:$0xf]
        %477 = vst [vmem:[#allocation1] ss:$4 sm:$0xff] %v473
        %v478 = vld.sshfl [vmem:[#allocation1] sm:$0xff pattern:$0x73625140]
        %v480 = vld.sshfl [vmem:[#allocation1 + $0x8] sm:$0xff pattern:$0x73625140]
        %v482 = vld.sshfl [vmem:[#allocation1 + $0x10] sm:$0xff pattern:$0x73625140]
        %v484 = vld.sshfl [vmem:[#allocation1 + $0x18] sm:$0xff pattern:$0x73625140]
        %486 = vrot.lane.b32.xlu0 %v478, 126
        %v487 = vpop.permute.xlu0 %486
        %488 = vrot.lane.b32.xlu0 %v480, 126
        %v489 = vpop.permute.xlu0 %488
        %490 = vrot.lane.b32.xlu0 %v482, 126
        %v491 = vpop.permute.xlu0 %490
        %492 = vrot.lane.b32.xlu0 %v484, 126
        %v493 = vpop.permute.xlu0 %492
        %vm494 = vcmask 1031168
        %v495 = vsel %vm494, %v487, %v489
        %v496 = vsel %vm494, %v489, %v491
        %v497 = vsel %vm494, %v491, %v493
        %v499 = vsel %vm367, %v475, 0
        %v502 = vsel %vm371, %v495, 0
        %v505 = vsel %vm371, %v496, 0
        %v508 = vsel %vm371, %v497, 0
        %510 = vmatpush.bf16.msra.mxu0 0
        %511 = vmatpush.bf16.msra.mxu0 0
        %512 = vmatpush.bf16.msra.mxu0 0
        %513 = vmatpush.bf16.msra.mxu0 0
        %514 = vmatpush.bf16.msra.mxu0 0
        %515 = vmatpush.bf16.msra.mxu0 0
        %516 = vmatpush.bf16.msra.mxu0 0
        %517 = vmatpush.bf16.msra.mxu0 %v502
        %518 = vmatmul.bf16.gmra.mxu0 %v499
        %v519 = vpop.f32.mrf.mxu0
        %v520 = vadd.f32 0.0, %v519
        %v521 = vpop.f32.mrf.mxu0
        %522 = vdwg.mxu0
        %523 = vmatpush.bf16.msra.mxu0 0
        %524 = vmatpush.bf16.msra.mxu0 0
        %525 = vmatpush.bf16.msra.mxu0 0
        %526 = vmatpush.bf16.msra.mxu0 0
        %527 = vmatpush.bf16.msra.mxu0 0
        %528 = vmatpush.bf16.msra.mxu0 0
        %529 = vmatpush.bf16.msra.mxu0 0
        %530 = vmatpush.bf16.msra.mxu0 %v505
        %531 = vmatmul.bf16.gmra.mxu0 %v499
        %v532 = vpop.f32.mrf.mxu0
        %v533 = vadd.f32 0.0, %v532
        %v534 = vpop.f32.mrf.mxu0
        %535 = vdwg.mxu0
        %536 = vmatpush.bf16.msra.mxu0 0
        %537 = vmatpush.bf16.msra.mxu0 0
        %538 = vmatpush.bf16.msra.mxu0 0
        %539 = vmatpush.bf16.msra.mxu0 0
        %540 = vmatpush.bf16.msra.mxu0 0
        %541 = vmatpush.bf16.msra.mxu0 0
        %542 = vmatpush.bf16.msra.mxu0 0
        %543 = vmatpush.bf16.msra.mxu0 %v508
        %544 = vmatmul.bf16.gmra.mxu0 %v499
        %v545 = vpop.f32.mrf.mxu0
        %v546 = vadd.f32 0.0, %v545
        %v547 = vpop.f32.mrf.mxu0
        %548 = vdwg.mxu0
        %v549 = vadd.f32 %v444, %v520
        %v550 = vadd.f32 %v457, %v533
        %v551 = vadd.f32 %v470, %v546
        %v552 = vld [vmem:[#allocation2] sm:$0xff]
        %s553 = scalar_lea.vmem %s329, 12
        %v554 = vld [vmem:[%s553] sm:$0xf]
        %556 = vst [vmem:[#allocation1] ss:$4 sm:$0xff] %v552
        %v557 = vld.sshfl [vmem:[#allocation1] sm:$0xff pattern:$0x73625140]
        %v559 = vld.sshfl [vmem:[#allocation1 + $0x8] sm:$0xff pattern:$0x73625140]
        %v561 = vld.sshfl [vmem:[#allocation1 + $0x10] sm:$0xff pattern:$0x73625140]
        %v563 = vld.sshfl [vmem:[#allocation1 + $0x18] sm:$0xff pattern:$0x73625140]
        %565 = vrot.lane.b32.xlu0 %v557, 110
        %v566 = vpop.permute.xlu0 %565
        %567 = vrot.lane.b32.xlu0 %v559, 110
        %v568 = vpop.permute.xlu0 %567
        %569 = vrot.lane.b32.xlu0 %v561, 110
        %v570 = vpop.permute.xlu0 %569
        %571 = vrot.lane.b32.xlu0 %v563, 110
        %v572 = vpop.permute.xlu0 %571
        %vm573 = vcmask 900096
        %v574 = vsel %vm573, %v566, %v568
        %v575 = vsel %vm573, %v568, %v570
        %v576 = vsel %vm573, %v570, %v572
        %v578 = vsel %vm367, %v554, 0
        %v581 = vsel %vm371, %v574, 0
        %v584 = vsel %vm371, %v575, 0
        %v587 = vsel %vm371, %v576, 0
        %589 = vmatpush.bf16.msra.mxu0 0
        %590 = vmatpush.bf16.msra.mxu0 0
        %591 = vmatpush.bf16.msra.mxu0 0
        %592 = vmatpush.bf16.msra.mxu0 0
        %593 = vmatpush.bf16.msra.mxu0 0
        %594 = vmatpush.bf16.msra.mxu0 0
        %595 = vmatpush.bf16.msra.mxu0 0
        %596 = vmatpush.bf16.msra.mxu0 %v581
        %597 = vmatmul.bf16.gmra.mxu0 %v578
        %v598 = vpop.f32.mrf.mxu0
        %v599 = vadd.f32 0.0, %v598
        %v600 = vpop.f32.mrf.mxu0
        %601 = vdwg.mxu0
        %602 = vmatpush.bf16.msra.mxu0 0
        %603 = vmatpush.bf16.msra.mxu0 0
        %604 = vmatpush.bf16.msra.mxu0 0
        %605 = vmatpush.bf16.msra.mxu0 0
        %606 = vmatpush.bf16.msra.mxu0 0
        %607 = vmatpush.bf16.msra.mxu0 0
        %608 = vmatpush.bf16.msra.mxu0 0
        %609 = vmatpush.bf16.msra.mxu0 %v584
        %610 = vmatmul.bf16.gmra.mxu0 %v578
        %v611 = vpop.f32.mrf.mxu0
        %v612 = vadd.f32 0.0, %v611
        %v613 = vpop.f32.mrf.mxu0
        %614 = vdwg.mxu0
        %615 = vmatpush.bf16.msra.mxu0 0
        %616 = vmatpush.bf16.msra.mxu0 0
        %617 = vmatpush.bf16.msra.mxu0 0
        %618 = vmatpush.bf16.msra.mxu0 0
        %619 = vmatpush.bf16.msra.mxu0 0
        %620 = vmatpush.bf16.msra.mxu0 0
        %621 = vmatpush.bf16.msra.mxu0 0
        %622 = vmatpush.bf16.msra.mxu0 %v587
        %623 = vmatmul.bf16.gmra.mxu0 %v578
        %v624 = vpop.f32.mrf.mxu0
        %v625 = vadd.f32 0.0, %v624
        %v626 = vpop.f32.mrf.mxu0
        %627 = vdwg.mxu0
        %v628 = vadd.f32 %v549, %v599
        %v629 = vadd.f32 %v550, %v612
        %v630 = vadd.f32 %v551, %v625
        %v631 = vld [vmem:[#allocation2] sm:$0xff]
        %s632 = scalar_lea.vmem %s329, 16
        %v633 = vld [vmem:[%s632] sm:$0xf]
        %635 = vst [vmem:[#allocation1] ss:$4 sm:$0xff] %v631
        %v636 = vld.sshfl [vmem:[#allocation1] sm:$0xff pattern:$0x73625140]
        %v638 = vld.sshfl [vmem:[#allocation1 + $0x8] sm:$0xff pattern:$0x73625140]
        %v640 = vld.sshfl [vmem:[#allocation1 + $0x10] sm:$0xff pattern:$0x73625140]
        %v642 = vld.sshfl [vmem:[#allocation1 + $0x18] sm:$0xff pattern:$0x73625140]
        %644 = vrot.lane.b32.xlu0 %v636, 109
        %v645 = vpop.permute.xlu0 %644
        %646 = vrot.lane.b32.xlu0 %v638, 109
        %v647 = vpop.permute.xlu0 %646
        %648 = vrot.lane.b32.xlu0 %v640, 109
        %v649 = vpop.permute.xlu0 %648
        %650 = vrot.lane.b32.xlu0 %v642, 109
        %v651 = vpop.permute.xlu0 %650
        %vm652 = vcmask 891904
        %v653 = vsel %vm652, %v645, %v647
        %v654 = vsel %vm652, %v647, %v649
        %v655 = vsel %vm652, %v649, %v651
        %v657 = vsel %vm367, %v633, 0
        %v660 = vsel %vm371, %v653, 0
        %v663 = vsel %vm371, %v654, 0
        %v666 = vsel %vm371, %v655, 0
        %668 = vmatpush.bf16.msra.mxu0 0
        %669 = vmatpush.bf16.msra.mxu0 0
        %670 = vmatpush.bf16.msra.mxu0 0
        %671 = vmatpush.bf16.msra.mxu0 0
        %672 = vmatpush.bf16.msra.mxu0 0
        %673 = vmatpush.bf16.msra.mxu0 0
        %674 = vmatpush.bf16.msra.mxu0 0
        %675 = vmatpush.bf16.msra.mxu0 %v660
        %676 = vmatmul.bf16.gmra.mxu0 %v657
        %v677 = vpop.f32.mrf.mxu0
        %v678 = vadd.f32 0.0, %v677
        %v679 = vpop.f32.mrf.mxu0
        %680 = vdwg.mxu0
        %681 = vmatpush.bf16.msra.mxu0 0
        %682 = vmatpush.bf16.msra.mxu0 0
        %683 = vmatpush.bf16.msra.mxu0 0
        %684 = vmatpush.bf16.msra.mxu0 0
        %685 = vmatpush.bf16.msra.mxu0 0
        %686 = vmatpush.bf16.msra.mxu0 0
        %687 = vmatpush.bf16.msra.mxu0 0
        %688 = vmatpush.bf16.msra.mxu0 %v663
        %689 = vmatmul.bf16.gmra.mxu0 %v657
        %v690 = vpop.f32.mrf.mxu0
        %v691 = vadd.f32 0.0, %v690
        %v692 = vpop.f32.mrf.mxu0
        %693 = vdwg.mxu0
        %694 = vmatpush.bf16.msra.mxu0 0
        %695 = vmatpush.bf16.msra.mxu0 0
        %696 = vmatpush.bf16.msra.mxu0 0
        %697 = vmatpush.bf16.msra.mxu0 0
        %698 = vmatpush.bf16.msra.mxu0 0
        %699 = vmatpush.bf16.msra.mxu0 0
        %700 = vmatpush.bf16.msra.mxu0 0
        %701 = vmatpush.bf16.msra.mxu0 %v666
        %702 = vmatmul.bf16.gmra.mxu0 %v657
        %v703 = vpop.f32.mrf.mxu0
        %v704 = vadd.f32 0.0, %v703
        %v705 = vpop.f32.mrf.mxu0
        %706 = vdwg.mxu0
        %v707 = vadd.f32 %v628, %v678
        %v708 = vadd.f32 %v629, %v691
        %v709 = vadd.f32 %v630, %v704
        %v710 = vld [vmem:[#allocation2] sm:$0xff]
        %s711 = scalar_lea.vmem %s329, 20
        %v712 = vld [vmem:[%s711] sm:$0xf]
        %714 = vst [vmem:[#allocation1] ss:$4 sm:$0xff] %v710
        %v715 = vld.sshfl [vmem:[#allocation1] sm:$0xff pattern:$0x73625140]
        %v717 = vld.sshfl [vmem:[#allocation1 + $0x8] sm:$0xff pattern:$0x73625140]
        %v719 = vld.sshfl [vmem:[#allocation1 + $0x10] sm:$0xff pattern:$0x73625140]
        %v721 = vld.sshfl [vmem:[#allocation1 + $0x18] sm:$0xff pattern:$0x73625140]
        %723 = vrot.lane.b32.xlu0 %v715, 108
        %v724 = vpop.permute.xlu0 %723
        %725 = vrot.lane.b32.xlu0 %v717, 108
        %v726 = vpop.permute.xlu0 %725
        %727 = vrot.lane.b32.xlu0 %v719, 108
        %v728 = vpop.permute.xlu0 %727
        %729 = vrot.lane.b32.xlu0 %v721, 108
        %v730 = vpop.permute.xlu0 %729
        %vm731 = vcmask 883712
        %v732 = vsel %vm731, %v724, %v726
        %v733 = vsel %vm731, %v726, %v728
        %v734 = vsel %vm731, %v728, %v730
        %v736 = vsel %vm367, %v712, 0
        %v739 = vsel %vm371, %v732, 0
        %v742 = vsel %vm371, %v733, 0
        %v745 = vsel %vm371, %v734, 0
        %747 = vmatpush.bf16.msra.mxu0 0
        %748 = vmatpush.bf16.msra.mxu0 0
        %749 = vmatpush.bf16.msra.mxu0 0
        %750 = vmatpush.bf16.msra.mxu0 0
        %751 = vmatpush.bf16.msra.mxu0 0
        %752 = vmatpush.bf16.msra.mxu0 0
        %753 = vmatpush.bf16.msra.mxu0 0
        %754 = vmatpush.bf16.msra.mxu0 %v739
        %755 = vmatmul.bf16.gmra.mxu0 %v736
        %v756 = vpop.f32.mrf.mxu0
        %v757 = vadd.f32 0.0, %v756
        %v758 = vpop.f32.mrf.mxu0
        %759 = vdwg.mxu0
        %760 = vmatpush.bf16.msra.mxu0 0
        %761 = vmatpush.bf16.msra.mxu0 0
        %762 = vmatpush.bf16.msra.mxu0 0
        %763 = vmatpush.bf16.msra.mxu0 0
        %764 = vmatpush.bf16.msra.mxu0 0
        %765 = vmatpush.bf16.msra.mxu0 0
        %766 = vmatpush.bf16.msra.mxu0 0
        %767 = vmatpush.bf16.msra.mxu0 %v742
        %768 = vmatmul.bf16.gmra.mxu0 %v736
        %v769 = vpop.f32.mrf.mxu0
        %v770 = vadd.f32 0.0, %v769
        %v771 = vpop.f32.mrf.mxu0
        %772 = vdwg.mxu0
        %773 = vmatpush.bf16.msra.mxu0 0
        %774 = vmatpush.bf16.msra.mxu0 0
        %775 = vmatpush.bf16.msra.mxu0 0
        %776 = vmatpush.bf16.msra.mxu0 0
        %777 = vmatpush.bf16.msra.mxu0 0
        %778 = vmatpush.bf16.msra.mxu0 0
        %779 = vmatpush.bf16.msra.mxu0 0
        %780 = vmatpush.bf16.msra.mxu0 %v745
        %781 = vmatmul.bf16.gmra.mxu0 %v736
        %v782 = vpop.f32.mrf.mxu0
        %v783 = vadd.f32 0.0, %v782
        %v784 = vpop.f32.mrf.mxu0
        %785 = vdwg.mxu0
        %v786 = vadd.f32 %v707, %v757
        %v787 = vadd.f32 %v708, %v770
        %v788 = vadd.f32 %v709, %v783
        %v789 = vld [vmem:[#allocation2] sm:$0xff]
        %s790 = scalar_lea.vmem %s329, 24
        %v791 = vld [vmem:[%s790] sm:$0xf]
        %793 = vst [vmem:[#allocation1] ss:$4 sm:$0xff] %v789
        %v794 = vld.sshfl [vmem:[#allocation1] sm:$0xff pattern:$0x73625140]
        %v796 = vld.sshfl [vmem:[#allocation1 + $0x8] sm:$0xff pattern:$0x73625140]
        %v798 = vld.sshfl [vmem:[#allocation1 + $0x10] sm:$0xff pattern:$0x73625140]
        %v800 = vld.sshfl [vmem:[#allocation1 + $0x18] sm:$0xff pattern:$0x73625140]
        %802 = vrot.lane.b32.xlu0 %v794, 92
        %v803 = vpop.permute.xlu0 %802
        %804 = vrot.lane.b32.xlu0 %v796, 92
        %v805 = vpop.permute.xlu0 %804
        %806 = vrot.lane.b32.xlu0 %v798, 92
        %v807 = vpop.permute.xlu0 %806
        %808 = vrot.lane.b32.xlu0 %v800, 92
        %v809 = vpop.permute.xlu0 %808
        %vm810 = vcmask 752640
        %v811 = vsel %vm810, %v803, %v805
        %v812 = vsel %vm810, %v805, %v807
        %v813 = vsel %vm810, %v807, %v809
        %v815 = vsel %vm367, %v791, 0
        %v818 = vsel %vm371, %v811, 0
        %v821 = vsel %vm371, %v812, 0
        %v824 = vsel %vm371, %v813, 0
        %826 = vmatpush.bf16.msra.mxu0 0
        %827 = vmatpush.bf16.msra.mxu0 0
        %828 = vmatpush.bf16.msra.mxu0 0
        %829 = vmatpush.bf16.msra.mxu0 0
        %830 = vmatpush.bf16.msra.mxu0 0
        %831 = vmatpush.bf16.msra.mxu0 0
        %832 = vmatpush.bf16.msra.mxu0 0
        %833 = vmatpush.bf16.msra.mxu0 %v818
        %834 = vmatmul.bf16.gmra.mxu0 %v815
        %v835 = vpop.f32.mrf.mxu0
        %v836 = vadd.f32 0.0, %v835
        %v837 = vpop.f32.mrf.mxu0
        %838 = vdwg.mxu0
        %839 = vmatpush.bf16.msra.mxu0 0
        %840 = vmatpush.bf16.msra.mxu0 0
        %841 = vmatpush.bf16.msra.mxu0 0
        %842 = vmatpush.bf16.msra.mxu0 0
        %843 = vmatpush.bf16.msra.mxu0 0
        %844 = vmatpush.bf16.msra.mxu0 0
        %845 = vmatpush.bf16.msra.mxu0 0
        %846 = vmatpush.bf16.msra.mxu0 %v821
        %847 = vmatmul.bf16.gmra.mxu0 %v815
        %v848 = vpop.f32.mrf.mxu0
        %v849 = vadd.f32 0.0, %v848
        %v850 = vpop.f32.mrf.mxu0
        %851 = vdwg.mxu0
        %852 = vmatpush.bf16.msra.mxu0 0
        %853 = vmatpush.bf16.msra.mxu0 0
        %854 = vmatpush.bf16.msra.mxu0 0
        %855 = vmatpush.bf16.msra.mxu0 0
        %856 = vmatpush.bf16.msra.mxu0 0
        %857 = vmatpush.bf16.msra.mxu0 0
        %858 = vmatpush.bf16.msra.mxu0 0
        %859 = vmatpush.bf16.msra.mxu0 %v824
        %860 = vmatmul.bf16.gmra.mxu0 %v815
        %v861 = vpop.f32.mrf.mxu0
        %v862 = vadd.f32 0.0, %v861
        %v863 = vpop.f32.mrf.mxu0
        %864 = vdwg.mxu0
        %v865 = vadd.f32 %v786, %v836
        %v866 = vadd.f32 %v787, %v849
        %v867 = vadd.f32 %v788, %v862
        %v868 = vld [vmem:[#allocation2] sm:$0xff]
        %s869 = scalar_lea.vmem %s329, 28
        %v870 = vld [vmem:[%s869] sm:$0xf]
        %872 = vst [vmem:[#allocation1] ss:$4 sm:$0xff] %v868
        %v873 = vld.sshfl [vmem:[#allocation1] sm:$0xff pattern:$0x73625140]
        %v875 = vld.sshfl [vmem:[#allocation1 + $0x8] sm:$0xff pattern:$0x73625140]
        %v877 = vld.sshfl [vmem:[#allocation1 + $0x10] sm:$0xff pattern:$0x73625140]
        %v879 = vld.sshfl [vmem:[#allocation1 + $0x18] sm:$0xff pattern:$0x73625140]
        %881 = vrot.lane.b32.xlu0 %v873, 91
        %v882 = vpop.permute.xlu0 %881
        %883 = vrot.lane.b32.xlu0 %v875, 91
        %v884 = vpop.permute.xlu0 %883
        %885 = vrot.lane.b32.xlu0 %v877, 91
        %v886 = vpop.permute.xlu0 %885
        %887 = vrot.lane.b32.xlu0 %v879, 91
        %v888 = vpop.permute.xlu0 %887
        %vm889 = vcmask 744448
        %v890 = vsel %vm889, %v882, %v884
        %v891 = vsel %vm889, %v884, %v886
        %v892 = vsel %vm889, %v886, %v888
        %v894 = vsel %vm367, %v870, 0
        %v897 = vsel %vm371, %v890, 0
        %v900 = vsel %vm371, %v891, 0
        %v903 = vsel %vm371, %v892, 0
        %905 = vmatpush.bf16.msra.mxu0 0
        %906 = vmatpush.bf16.msra.mxu0 0
        %907 = vmatpush.bf16.msra.mxu0 0
        %908 = vmatpush.bf16.msra.mxu0 0
        %909 = vmatpush.bf16.msra.mxu0 0
        %910 = vmatpush.bf16.msra.mxu0 0
        %911 = vmatpush.bf16.msra.mxu0 0
        %912 = vmatpush.bf16.msra.mxu0 %v897
        %913 = vmatmul.bf16.gmra.mxu0 %v894
        %v914 = vpop.f32.mrf.mxu0
        %v915 = vadd.f32 0.0, %v914
        %v916 = vpop.f32.mrf.mxu0
        %917 = vdwg.mxu0
        %918 = vmatpush.bf16.msra.mxu0 0
        %919 = vmatpush.bf16.msra.mxu0 0
        %920 = vmatpush.bf16.msra.mxu0 0
        %921 = vmatpush.bf16.msra.mxu0 0
        %922 = vmatpush.bf16.msra.mxu0 0
        %923 = vmatpush.bf16.msra.mxu0 0
        %924 = vmatpush.bf16.msra.mxu0 0
        %925 = vmatpush.bf16.msra.mxu0 %v900
        %926 = vmatmul.bf16.gmra.mxu0 %v894
        %v927 = vpop.f32.mrf.mxu0
        %v928 = vadd.f32 0.0, %v927
        %v929 = vpop.f32.mrf.mxu0
        %930 = vdwg.mxu0
        %931 = vmatpush.bf16.msra.mxu0 0
        %932 = vmatpush.bf16.msra.mxu0 0
        %933 = vmatpush.bf16.msra.mxu0 0
        %934 = vmatpush.bf16.msra.mxu0 0
        %935 = vmatpush.bf16.msra.mxu0 0
        %936 = vmatpush.bf16.msra.mxu0 0
        %937 = vmatpush.bf16.msra.mxu0 0
        %938 = vmatpush.bf16.msra.mxu0 %v903
        %939 = vmatmul.bf16.gmra.mxu0 %v894
        %v940 = vpop.f32.mrf.mxu0
        %v941 = vadd.f32 0.0, %v940
        %v942 = vpop.f32.mrf.mxu0
        %943 = vdwg.mxu0
        %v944 = vadd.f32 %v865, %v915
        %v945 = vadd.f32 %v866, %v928
        %v946 = vadd.f32 %v867, %v941
        %v947 = vld [vmem:[#allocation2] sm:$0xff]
        %s948 = scalar_lea.vmem %s329, 32
        %v949 = vld [vmem:[%s948] sm:$0xf]
        %951 = vst [vmem:[#allocation1] ss:$4 sm:$0xff] %v947
        %v952 = vld.sshfl [vmem:[#allocation1] sm:$0xff pattern:$0x73625140]
        %v954 = vld.sshfl [vmem:[#allocation1 + $0x8] sm:$0xff pattern:$0x73625140]
        %v956 = vld.sshfl [vmem:[#allocation1 + $0x10] sm:$0xff pattern:$0x73625140]
        %v958 = vld.sshfl [vmem:[#allocation1 + $0x18] sm:$0xff pattern:$0x73625140]
        %960 = vrot.lane.b32.xlu0 %v952, 90
        %v961 = vpop.permute.xlu0 %960
        %962 = vrot.lane.b32.xlu0 %v954, 90
        %v963 = vpop.permute.xlu0 %962
        %964 = vrot.lane.b32.xlu0 %v956, 90
        %v965 = vpop.permute.xlu0 %964
        %966 = vrot.lane.b32.xlu0 %v958, 90
        %v967 = vpop.permute.xlu0 %966
        %vm968 = vcmask 736256
        %v969 = vsel %vm968, %v961, %v963
        %v970 = vsel %vm968, %v963, %v965
        %v971 = vsel %vm968, %v965, %v967
        %v973 = vsel %vm367, %v949, 0
        %v976 = vsel %vm371, %v969, 0
        %v979 = vsel %vm371, %v970, 0
        %v982 = vsel %vm371, %v971, 0
        %984 = vmatpush.bf16.msra.mxu0 0
        %985 = vmatpush.bf16.msra.mxu0 0
        %986 = vmatpush.bf16.msra.mxu0 0
        %987 = vmatpush.bf16.msra.mxu0 0
        %988 = vmatpush.bf16.msra.mxu0 0
        %989 = vmatpush.bf16.msra.mxu0 0
        %990 = vmatpush.bf16.msra.mxu0 0
        %991 = vmatpush.bf16.msra.mxu0 %v976
        %992 = vmatmul.bf16.gmra.mxu0 %v973
        %v993 = vpop.f32.mrf.mxu0
        %v994 = vadd.f32 0.0, %v993
        %v995 = vpop.f32.mrf.mxu0
        %996 = vdwg.mxu0
        %997 = vmatpush.bf16.msra.mxu0 0
        %998 = vmatpush.bf16.msra.mxu0 0
        %999 = vmatpush.bf16.msra.mxu0 0
        %1000 = vmatpush.bf16.msra.mxu0 0
        %1001 = vmatpush.bf16.msra.mxu0 0
        %1002 = vmatpush.bf16.msra.mxu0 0
        %1003 = vmatpush.bf16.msra.mxu0 0
        %1004 = vmatpush.bf16.msra.mxu0 %v979
        %1005 = vmatmul.bf16.gmra.mxu0 %v973
        %v1006 = vpop.f32.mrf.mxu0
        %v1007 = vadd.f32 0.0, %v1006
        %v1008 = vpop.f32.mrf.mxu0
        %1009 = vdwg.mxu0
        %1010 = vmatpush.bf16.msra.mxu0 0
        %1011 = vmatpush.bf16.msra.mxu0 0
        %1012 = vmatpush.bf16.msra.mxu0 0
        %1013 = vmatpush.bf16.msra.mxu0 0
        %1014 = vmatpush.bf16.msra.mxu0 0
        %1015 = vmatpush.bf16.msra.mxu0 0
        %1016 = vmatpush.bf16.msra.mxu0 0
        %1017 = vmatpush.bf16.msra.mxu0 %v982
        %1018 = vmatmul.bf16.gmra.mxu0 %v973
        %v1019 = vpop.f32.mrf.mxu0
        %v1020 = vadd.f32 0.0, %v1019
        %v1021 = vpop.f32.mrf.mxu0
        %1022 = vdwg.mxu0
        %v1023 = vadd.f32 %v944, %v994
        %v1024 = vadd.f32 %v945, %v1007
        %v1025 = vadd.f32 %v946, %v1020
        %v1026 = vld [vmem:[%s333] sm:$0xff]
        %1028 = vset.pattern.permute.xlu0 0
        %1029 = vperm.xlu0 %1028, %v1026
        %v1030 = vpop.permute.xlu0 %1029
        %v1032 = vadd.f32 %v1023, %v1030
        %v1033 = vadd.f32 %v1024, %v1030
        %v1034 = vadd.f32 %v1025, %v1030
        %v1035 = vmax.f32 %v1032, 0.0
        %v1036 = vmax.f32 %v1033, 0.0
        %v1037 = vmax.f32 %v1034, 0.0
        %1038 = vst [vmem:[%s295] sm:$0xff] %v1035
        %1039 = vst [vmem:[%s295 + $0x8] sm:$0xff] %v1036
        %1040 = vst [vmem:[%s295 + $0x10] sm:$0xff] %v1037
        %s1041 = sand.u32 %s161, 1
        %s1042 = scalar_lea.sflag [#allocation4], %s1041
        %s1043 = sand.u32 %s161, 1
        %s1044 = smul.addr %s1043, 24
        %s1045 = scalar_lea.vmem [#allocation3], %s1044
        // Predicated region
        $region37: #{tpu_custom_call.1} parent=35 // pred_check
          %p1046 = pneg %p171
        $region38: #{tpu_custom_call.1} parent=35 // pred_check_branch
          %1048 = sbr.rel (%p1046) target = $region40
        $region39: #{tpu_custom_call.1} parent=35 // pred_region
          %s1049 = smul.u32 3, %s24
          %1051 = vsyncadd %s1042, 0
          %s1052 = smul.addr %s25, 3
          %s1053 = sadd.s32 %s1049, %s1052
          %s1054 = smul.addr %s23, 3
          %s1055 = sadd.s32 %s1053, %s1054
          %s1056 = smul.addr %s1055, 8
          %s1057 = scalar_lea.hbm %s4, %s1056
          %s1059 = sshll.u32 %s1045, 4
          %s1060 = int_to_ptr.vmem [resolvable:$true] %s1059
          %s1061 = sshll.u32 %s1057, 4
          %s1062 = int_to_ptr.hbm [resolvable:$true] %s1061
          %1064 = dma.vmem_to_hbm [thread:$0]  %s1060, 384, %s1062, %s1042
        $region40: #{tpu_custom_call.1} parent=35 // pred_fallthru
          _
      $region36: #{tpu_custom_call.1} parent=5 // pred_fallthru
        _
      %p1065 = scmp.le.s32.totalorder 2, %s13
      // Predicated region
      $region41: #{tpu_custom_call.1} parent=5 // pred_check
        %p1066 = pneg %p1065
      $region42: #{tpu_custom_call.1} parent=5 // pred_check_branch
        %1068 = sbr.rel (%p1066) target = $region44
      $region43: #{tpu_custom_call.1} parent=5 // pred_region
        %s1069 = ssub.s32 %s13, 2
        // Predicated region
        $region45: #{tpu_custom_call.1} parent=43 // pred_check
          %p1070 = pneg %p177
        $region46: #{tpu_custom_call.1} parent=43 // pred_check_branch
          %1072 = sbr.rel (%p1070) target = $region48
        $region47: #{tpu_custom_call.1} parent=43 // pred_region
          %s1073 = sand.u32 %s162, 1
          %s1074 = scalar_lea.sflag [#allocation4], %s1073
          %s1075 = sand.u32 %s162, 1
          %s1076 = smul.addr %s1075, 24
          %s1077 = scalar_lea.vmem [#allocation3], %s1076
          %1079 = dma.done %s1074, 384
        $region48: #{tpu_custom_call.1} parent=43 // pred_fallthru
          _
      $region44: #{tpu_custom_call.1} parent=5 // pred_fallthru
        _
    $region6: #{tpu_custom_call.1} parent=1 // loop_footer
      %s17 = sadd.s32 1, %s13
    $region7: #{tpu_custom_call.1} parent=1 // loop_footer_branch
      %12 = sbr.rel target = $region3
    $region8: #{tpu_custom_call.1} parent=1 // loop_exit
      _
    %1080 = vsyncpa [#allocation4], 1
    %s1081 = scalar_lea.sflag [#allocation4], 1
    %1082 = vsyncpa %s1081, 1

</llo_original>
